<compile_context>
chip_gen: v6e
topology: v6e:2x2x1
jax: 0.10.0
libtpu: 0.0.40
codegen_flags: <defaults>
</compile_context>

<pallas_src>
import jax
import jax.numpy as jnp
from jax.experimental import pallas as pl
from jax.experimental.pallas import tpu as pltpu

N_CAPS = 36          # fixed in the module (weight second dim == 36)
ATT_DIM = 32         # stand-in for cfg.MODEL.BILINEAR.ATT_DIM
ROUTINGS = 3


def capsule_kernel(x_ref, w_ref, o_ref):
    # x_ref: (TB, N*D)   lane-dense flattened batch tile
    # w_ref: (N*D, D)    concatenated per-capsule transforms, W_cat[n*D+j, i]=w[n,i,j]
    # o_ref: (TB, D)     squashed routed capsule per batch row
    #
    # Routing collapse: softmax over an axis of size 1 => c == 1 for every
    # routing iteration, so outputs = squash(sum_n x_hat[n]) on every pass and
    # the b/agreement updates never influence the forward result.  One MXU
    # matmul therefore reproduces the module's forward output exactly.
    s = jnp.dot(x_ref[...], w_ref[...], preferred_element_type=jnp.float32)  # (TB, D)

    # squash(s) along the last axis: scale = |s|^2 / (1+|s|^2) / (|s|+eps)
    ss = jnp.sum(s * s, axis=-1, keepdims=True)          # |s|^2
    norm = jnp.sqrt(ss)
    scale = ss / ((1.0 + ss) * (norm + 1e-8))
    o_ref[...] = (scale * s).astype(o_ref.dtype)


def capsule_forward(x, weight, routings=ROUTINGS, block_b=512):
    """x: (B, 36, D) f32, weight: (1, 36, D, D) f32 -> (B, 1, D) f32."""
    assert routings > 0, "The 'routings' should be > 0."
    B, N, D = x.shape
    assert weight.shape == (1, N, D, D)

    # Lane-dense layout: x -> (B, N*D) (N*D = 1152 = 9*128 lanes, fully dense),
    # weight -> (N*D, D) with W_cat[n*D + j, i] = w[n, i, j].
    w_cat = jnp.transpose(weight.reshape(N, D, D), (0, 2, 1)).reshape(N * D, D)
    x_flat = x.reshape(B, N * D)

    if B <= block_b:
        # Single tile covering the whole (small) batch; block dim == array dim
        # satisfies the (8,128) rule without padding.
        tb = B
        bp = B
    else:
        tb = block_b                      # multiple of 8
        bp = pl.cdiv(B, tb) * tb
        if bp != B:
            x_flat = jnp.pad(x_flat, ((0, bp - B), (0, 0)))  # zero rows squash to 0

    out = pl.pallas_call(
        capsule_kernel,
        out_shape=jax.ShapeDtypeStruct((bp, D), x.dtype),
        grid=(bp // tb,),
        in_specs=[
            pl.BlockSpec((tb, N * D), lambda b: (b, 0)),
            pl.BlockSpec((N * D, D), lambda b: (0, 0)),
        ],
        out_specs=pl.BlockSpec((tb, D), lambda b: (b, 0)),
        compiler_params=pltpu.CompilerParams(
            dimension_semantics=("parallel",),
        ),
    )(x_flat, w_cat)

    return out[:B, None, :]   # (B, 1, D), matching torch.squeeze(outputs, dim=-2)


def capsule_reference(x, weight, routings=ROUTINGS):
    # Pure-JAX reference mirroring the torch forward exactly (loop + softmax).
    x_hat = jnp.squeeze(jnp.matmul(weight, x[:, None, :, :, None]), axis=-1)  # (B,1,36,D)
    b = jnp.zeros((x.shape[0], 1, x.shape[1]), jnp.float32)
    outputs = None
    for i in range(routings):
        c = jax.nn.softmax(b, axis=1)
        s = jnp.sum(c[:, :, :, None] * x_hat, axis=-2, keepdims=True)
        norm = jnp.sqrt(jnp.sum(s * s, axis=-1, keepdims=True))
        scale = norm ** 2 / (1 + norm ** 2) / (norm + 1e-8)
        outputs = scale * s
        if i < routings - 1:
            b = b + jnp.sum(outputs * x_hat, axis=-1)
    return jnp.squeeze(outputs, axis=-2)   # (B, 1, D)


if __name__ == "__main__":
    key = jax.random.PRNGKey(0)
    kx, kw = jax.random.split(key)

    B = 2
    x = jax.random.normal(kx, (B, N_CAPS, ATT_DIM), dtype=jnp.float32)
    # Deterministic synthetic weight: 0.01 * randn(1, 36, D, D), like __init__.
    weight = 0.01 * jax.random.normal(kw, (1, N_CAPS, ATT_DIM, ATT_DIM),
                                      dtype=jnp.float32)

    out = jax.block_until_ready(capsule_forward(x, weight))
    ref = jax.block_until_ready(capsule_reference(x, weight))

    assert out.shape == (B, 1, ATT_DIM)
    assert jnp.allclose(out, ref, atol=1e-5, rtol=1e-5)
    print("KERNEL_OK")
</pallas_src>

<mosaic_0001>
module attributes {stable_mosaic.version = 11 : i64} {
  func.func @capsule_kernel(%arg0: i32, %arg1: memref<2x1152xf32, #tpu.memory_space<vmem>>, %arg2: memref<1152x32xf32, #tpu.memory_space<vmem>>, %arg3: memref<2x32xf32, #tpu.memory_space<vmem>>) attributes {dimension_semantics = [#tpu.dimension_semantics<parallel>], iteration_bounds = array<i64: 1>, scalar_prefetch = 0 : i64, scratch_operands = 0 : i64, tpu.core_type = #tpu.core_type<tc>, window_params = [{transform_indices = @transform_0, window_bounds = array<i64: 2, 1152>}, {pipeline_mode = #tpu.pipeline_mode<synchronous>, transform_indices = @transform_1, window_bounds = array<i64: 1152, 32>}, {transform_indices = @transform_2, window_bounds = array<i64: 2, 32>}]} {
    %c0 = arith.constant 0 : index
    %c0_0 = arith.constant 0 : index
    %0 = vector.load %arg1[%c0, %c0_0] : memref<2x1152xf32, #tpu.memory_space<vmem>>, vector<2x1152xf32>
    %c0_1 = arith.constant 0 : index
    %c0_2 = arith.constant 0 : index
    %1 = vector.load %arg2[%c0_1, %c0_2] : memref<1152x32xf32, #tpu.memory_space<vmem>>, vector<1152x32xf32>
    %cst = arith.constant dense<0.000000e+00> : vector<2x32xf32>
    %2 = tpu.matmul %0, %1, %cst {dimension_numbers = #tpu.dot_dimension_numbers<[1], [0], [0], [1], [0, 0, 1, 1], [], []>} : vector<2x1152xf32>, vector<1152x32xf32>, vector<2x32xf32> -> vector<2x32xf32>
    %3 = arith.mulf %2, %2 : vector<2x32xf32>
    %cst_3 = arith.constant dense<0.000000e+00> : vector<2xf32>
    %4 = vector.multi_reduction <add>, %3, %cst_3 [1] : vector<2x32xf32> to vector<2xf32>
    %5 = vector.shape_cast %4 : vector<2xf32> to vector<2x1xf32>
    %6 = math.sqrt %5 : vector<2x1xf32>
    %cst_4 = arith.constant 1.000000e+00 : f32
    %7 = vector.broadcast %cst_4 : f32 to vector<2x1xf32>
    %8 = arith.addf %7, %5 : vector<2x1xf32>
    %cst_5 = arith.constant 9.99999993E-9 : f32
    %9 = vector.broadcast %cst_5 : f32 to vector<2x1xf32>
    %10 = arith.addf %6, %9 : vector<2x1xf32>
    %11 = arith.mulf %8, %10 : vector<2x1xf32>
    %12 = arith.divf %5, %11 : vector<2x1xf32>
    %13 = vector.broadcast %12 : vector<2x1xf32> to vector<2x32xf32>
    %14 = arith.mulf %13, %2 : vector<2x32xf32>
    %c0_6 = arith.constant 0 : index
    %c0_7 = arith.constant 0 : index
    %15 = vector.load %arg3[%c0_6, %c0_7] : memref<2x32xf32, #tpu.memory_space<vmem>>, vector<2x32xf32>
    tpu.vector_store %arg3[%c0_6, %c0_7], %14 {strides = array<i32>} : memref<2x32xf32, #tpu.memory_space<vmem>>, vector<2x32xf32>,
    return
  }
  func.func @transform_0(%arg0: i32) -> (i32, i32) {
    %c0_i32 = arith.constant 0 : i32
    %c0_i32_0 = arith.constant 0 : i32
    return %arg0, %c0_i32 : i32, i32
  }
  func.func @transform_1(%arg0: i32) -> (i32, i32) {
    %c0_i32 = arith.constant 0 : i32
    %c0_i32_0 = arith.constant 0 : i32
    %c0_i32_1 = arith.constant 0 : i32
    return %c0_i32, %c0_i32_0 : i32, i32
  }
  func.func @transform_2(%arg0: i32) -> (i32, i32) {
    %c0_i32 = arith.constant 0 : i32
    %c0_i32_0 = arith.constant 0 : i32
    return %arg0, %c0_i32 : i32, i32
  }
}

</mosaic_0001>

<llo_original>
// kernel: tpu_custom_call.1
$region0: #{tpu_custom_call.1}
  #allocation0 [shape = 'u32[]', space=smem, size = 0x4, offset = 0x4, fixed_abs, tag = 'smem constant byte address 0x4 - core index']
  #allocation1 [shape = 'u32[144,128]{1,0:T(1,128)}', space=vmem, size = 0x12000, scoped, tag = 'internal scratch']
  %s0 = inlined_call_operand.vmem [shape: f32[2,1152], index: 0, kind: input, shape index: {}]
  %s1 = inlined_call_operand.vmem [shape: f32[1152,32], index: 1, kind: input, shape index: {}]
  %s2 = inlined_call_operand.hbm [shape: f32[2,32], index: 2, kind: output, shape index: {}]
  %s3 = sld [smem:[#allocation0]]
  $region18: #{tpu_custom_call.1} parent=0
    _
  %s5 = ssub.s32 1, %s3
  %s6 = scalar_select 0, %s5, %s3
  $region1: #{tpu_custom_call.1} parent=0
    #allocation2 [shape = 'u8[1024]{0}', space=vmem, size = 0x400, scoped, tag = 'output window, operand 0, single buffered']
    #allocation3 [shape = 's32[1]{0}', space=sflag, size = 0x4, scoped, tag = 'scoped memory for tpu_custom_call.1']
    %7 = vsyncpa [#allocation3], 0
    // Predicated region
    $region2: #{tpu_custom_call.1} parent=1 // pred_check
      _
    $region3: #{tpu_custom_call.1} parent=1 // pred_check_branch
      %9 = sbr.rel (0) target = $region5
    $region4: #{tpu_custom_call.1} parent=1 // pred_region
      _
    $region5: #{tpu_custom_call.1} parent=1 // pred_fallthru
      _
    // Predicated region
    $region6: #{tpu_custom_call.1} parent=1 // pred_check
      _
    $region7: #{tpu_custom_call.1} parent=1 // pred_check_branch
      %11 = sbr.rel (0) target = $region9
    $region8: #{tpu_custom_call.1} parent=1 // pred_region
      _
    $region9: #{tpu_custom_call.1} parent=1 // pred_fallthru
      _
    %v12 = vld [vmem:[%s0] sm:$0xff]
    %v13 = vld [vmem:[%s0 + $0x8] sm:$0xff]
    %v14 = vld [vmem:[%s0 + $0x10] sm:$0x3]
    %v15 = vld [vmem:[%s1] sm:$0xff]
    %v16 = vld [vmem:[%s1 + $0x8] sm:$0xff]
    %v17 = vld [vmem:[%s1 + $0x10] sm:$0xff]
    %v18 = vld [vmem:[%s1 + $0x18] sm:$0xff]
    %v19 = vld [vmem:[%s1 + $0x20] sm:$0xff]
    %v20 = vld [vmem:[%s1 + $0x28] sm:$0xff]
    %v21 = vld [vmem:[%s1 + $0x30] sm:$0xff]
    %v22 = vld [vmem:[%s1 + $0x38] sm:$0xff]
    %v23 = vld [vmem:[%s1 + $0x40] sm:$0xff]
    %v24 = vld [vmem:[%s1 + $0x48] sm:$0xff]
    %v25 = vld [vmem:[%s1 + $0x50] sm:$0xff]
    %v26 = vld [vmem:[%s1 + $0x58] sm:$0xff]
    %v27 = vld [vmem:[%s1 + $0x60] sm:$0xff]
    %v28 = vld [vmem:[%s1 + $0x68] sm:$0xff]
    %v29 = vld [vmem:[%s1 + $0x70] sm:$0xff]
    %v30 = vld [vmem:[%s1 + $0x78] sm:$0xff]
    %v31 = vld [vmem:[%s1 + $0x80] sm:$0xff]
    %v32 = vld [vmem:[%s1 + $0x88] sm:$0xff]
    %v33 = vld [vmem:[%s1 + $0x90] sm:$0xff]
    %v34 = vld [vmem:[%s1 + $0x98] sm:$0xff]
    %v35 = vld [vmem:[%s1 + $0xa0] sm:$0xff]
    %v36 = vld [vmem:[%s1 + $0xa8] sm:$0xff]
    %v37 = vld [vmem:[%s1 + $0xb0] sm:$0xff]
    %v38 = vld [vmem:[%s1 + $0xb8] sm:$0xff]
    %v39 = vld [vmem:[%s1 + $0xc0] sm:$0xff]
    %v40 = vld [vmem:[%s1 + $0xc8] sm:$0xff]
    %v41 = vld [vmem:[%s1 + $0xd0] sm:$0xff]
    %v42 = vld [vmem:[%s1 + $0xd8] sm:$0xff]
    %v43 = vld [vmem:[%s1 + $0xe0] sm:$0xff]
    %v44 = vld [vmem:[%s1 + $0xe8] sm:$0xff]
    %v45 = vld [vmem:[%s1 + $0xf0] sm:$0xff]
    %v46 = vld [vmem:[%s1 + $0xf8] sm:$0xff]
    %v47 = vld [vmem:[%s1 + $0x100] sm:$0xff]
    %v48 = vld [vmem:[%s1 + $0x108] sm:$0xff]
    %v49 = vld [vmem:[%s1 + $0x110] sm:$0xff]
    %v50 = vld [vmem:[%s1 + $0x118] sm:$0xff]
    %v51 = vld [vmem:[%s1 + $0x120] sm:$0xff]
    %v52 = vld [vmem:[%s1 + $0x128] sm:$0xff]
    %v53 = vld [vmem:[%s1 + $0x130] sm:$0xff]
    %v54 = vld [vmem:[%s1 + $0x138] sm:$0xff]
    %v55 = vld [vmem:[%s1 + $0x140] sm:$0xff]
    %v56 = vld [vmem:[%s1 + $0x148] sm:$0xff]
    %v57 = vld [vmem:[%s1 + $0x150] sm:$0xff]
    %v58 = vld [vmem:[%s1 + $0x158] sm:$0xff]
    %v59 = vld [vmem:[%s1 + $0x160] sm:$0xff]
    %v60 = vld [vmem:[%s1 + $0x168] sm:$0xff]
    %v61 = vld [vmem:[%s1 + $0x170] sm:$0xff]
    %v62 = vld [vmem:[%s1 + $0x178] sm:$0xff]
    %v63 = vld [vmem:[%s1 + $0x180] sm:$0xff]
    %v64 = vld [vmem:[%s1 + $0x188] sm:$0xff]
    %v65 = vld [vmem:[%s1 + $0x190] sm:$0xff]
    %v66 = vld [vmem:[%s1 + $0x198] sm:$0xff]
    %v67 = vld [vmem:[%s1 + $0x1a0] sm:$0xff]
    %v68 = vld [vmem:[%s1 + $0x1a8] sm:$0xff]
    %v69 = vld [vmem:[%s1 + $0x1b0] sm:$0xff]
    %v70 = vld [vmem:[%s1 + $0x1b8] sm:$0xff]
    %v71 = vld [vmem:[%s1 + $0x1c0] sm:$0xff]
    %v72 = vld [vmem:[%s1 + $0x1c8] sm:$0xff]
    %v73 = vld [vmem:[%s1 + $0x1d0] sm:$0xff]
    %v74 = vld [vmem:[%s1 + $0x1d8] sm:$0xff]
    %v75 = vld [vmem:[%s1 + $0x1e0] sm:$0xff]
    %v76 = vld [vmem:[%s1 + $0x1e8] sm:$0xff]
    %v77 = vld [vmem:[%s1 + $0x1f0] sm:$0xff]
    %v78 = vld [vmem:[%s1 + $0x1f8] sm:$0xff]
    %v79 = vld [vmem:[%s1 + $0x200] sm:$0xff]
    %v80 = vld [vmem:[%s1 + $0x208] sm:$0xff]
    %v81 = vld [vmem:[%s1 + $0x210] sm:$0xff]
    %v82 = vld [vmem:[%s1 + $0x218] sm:$0xff]
    %v83 = vld [vmem:[%s1 + $0x220] sm:$0xff]
    %v84 = vld [vmem:[%s1 + $0x228] sm:$0xff]
    %v85 = vld [vmem:[%s1 + $0x230] sm:$0xff]
    %v86 = vld [vmem:[%s1 + $0x238] sm:$0xff]
    %v87 = vld [vmem:[%s1 + $0x240] sm:$0xff]
    %v88 = vld [vmem:[%s1 + $0x248] sm:$0xff]
    %v89 = vld [vmem:[%s1 + $0x250] sm:$0xff]
    %v90 = vld [vmem:[%s1 + $0x258] sm:$0xff]
    %v91 = vld [vmem:[%s1 + $0x260] sm:$0xff]
    %v92 = vld [vmem:[%s1 + $0x268] sm:$0xff]
    %v93 = vld [vmem:[%s1 + $0x270] sm:$0xff]
    %v94 = vld [vmem:[%s1 + $0x278] sm:$0xff]
    %v95 = vld [vmem:[%s1 + $0x280] sm:$0xff]
    %v96 = vld [vmem:[%s1 + $0x288] sm:$0xff]
    %v97 = vld [vmem:[%s1 + $0x290] sm:$0xff]
    %v98 = vld [vmem:[%s1 + $0x298] sm:$0xff]
    %v99 = vld [vmem:[%s1 + $0x2a0] sm:$0xff]
    %v100 = vld [vmem:[%s1 + $0x2a8] sm:$0xff]
    %v101 = vld [vmem:[%s1 + $0x2b0] sm:$0xff]
    %v102 = vld [vmem:[%s1 + $0x2b8] sm:$0xff]
    %v103 = vld [vmem:[%s1 + $0x2c0] sm:$0xff]
    %v104 = vld [vmem:[%s1 + $0x2c8] sm:$0xff]
    %v105 = vld [vmem:[%s1 + $0x2d0] sm:$0xff]
    %v106 = vld [vmem:[%s1 + $0x2d8] sm:$0xff]
    %v107 = vld [vmem:[%s1 + $0x2e0] sm:$0xff]
    %v108 = vld [vmem:[%s1 + $0x2e8] sm:$0xff]
    %v109 = vld [vmem:[%s1 + $0x2f0] sm:$0xff]
    %v110 = vld [vmem:[%s1 + $0x2f8] sm:$0xff]
    %v111 = vld [vmem:[%s1 + $0x300] sm:$0xff]
    %v112 = vld [vmem:[%s1 + $0x308] sm:$0xff]
    %v113 = vld [vmem:[%s1 + $0x310] sm:$0xff]
    %v114 = vld [vmem:[%s1 + $0x318] sm:$0xff]
    %v115 = vld [vmem:[%s1 + $0x320] sm:$0xff]
    %v116 = vld [vmem:[%s1 + $0x328] sm:$0xff]
    %v117 = vld [vmem:[%s1 + $0x330] sm:$0xff]
    %v118 = vld [vmem:[%s1 + $0x338] sm:$0xff]
    %v119 = vld [vmem:[%s1 + $0x340] sm:$0xff]
    %v120 = vld [vmem:[%s1 + $0x348] sm:$0xff]
    %v121 = vld [vmem:[%s1 + $0x350] sm:$0xff]
    %v122 = vld [vmem:[%s1 + $0x358] sm:$0xff]
    %v123 = vld [vmem:[%s1 + $0x360] sm:$0xff]
    %v124 = vld [vmem:[%s1 + $0x368] sm:$0xff]
    %v125 = vld [vmem:[%s1 + $0x370] sm:$0xff]
    %v126 = vld [vmem:[%s1 + $0x378] sm:$0xff]
    %v127 = vld [vmem:[%s1 + $0x380] sm:$0xff]
    %v128 = vld [vmem:[%s1 + $0x388] sm:$0xff]
    %v129 = vld [vmem:[%s1 + $0x390] sm:$0xff]
    %v130 = vld [vmem:[%s1 + $0x398] sm:$0xff]
    %v131 = vld [vmem:[%s1 + $0x3a0] sm:$0xff]
    %v132 = vld [vmem:[%s1 + $0x3a8] sm:$0xff]
    %v133 = vld [vmem:[%s1 + $0x3b0] sm:$0xff]
    %v134 = vld [vmem:[%s1 + $0x3b8] sm:$0xff]
    %v135 = vld [vmem:[%s1 + $0x3c0] sm:$0xff]
    %v136 = vld [vmem:[%s1 + $0x3c8] sm:$0xff]
    %v137 = vld [vmem:[%s1 + $0x3d0] sm:$0xff]
    %v138 = vld [vmem:[%s1 + $0x3d8] sm:$0xff]
    %v139 = vld [vmem:[%s1 + $0x3e0] sm:$0xff]
    %v140 = vld [vmem:[%s1 + $0x3e8] sm:$0xff]
    %v141 = vld [vmem:[%s1 + $0x3f0] sm:$0xff]
    %v142 = vld [vmem:[%s1 + $0x3f8] sm:$0xff]
    %v143 = vld [vmem:[%s1 + $0x400] sm:$0xff]
    %v144 = vld [vmem:[%s1 + $0x408] sm:$0xff]
    %v145 = vld [vmem:[%s1 + $0x410] sm:$0xff]
    %v146 = vld [vmem:[%s1 + $0x418] sm:$0xff]
    %v147 = vld [vmem:[%s1 + $0x420] sm:$0xff]
    %v148 = vld [vmem:[%s1 + $0x428] sm:$0xff]
    %v149 = vld [vmem:[%s1 + $0x430] sm:$0xff]
    %v150 = vld [vmem:[%s1 + $0x438] sm:$0xff]
    %v151 = vld [vmem:[%s1 + $0x440] sm:$0xff]
    %v152 = vld [vmem:[%s1 + $0x448] sm:$0xff]
    %v153 = vld [vmem:[%s1 + $0x450] sm:$0xff]
    %v154 = vld [vmem:[%s1 + $0x458] sm:$0xff]
    %v155 = vld [vmem:[%s1 + $0x460] sm:$0xff]
    %v156 = vld [vmem:[%s1 + $0x468] sm:$0xff]
    %v157 = vld [vmem:[%s1 + $0x470] sm:$0xff]
    %v158 = vld [vmem:[%s1 + $0x478] sm:$0xff]
    %v162 = vcombine.high %v12, %v12
    %v164 = vunpack.c.l.s4 1983009808
    %v165 = vunpack.c.0.s8 %v164
    %v166 = vlaneseq
    %v167 = vshrl.u32 %v166, 7
    %v168 = vsub.s32 %v165, %v167
    %v169 = vrot.slane %v12, %v168
    %v171 = vunpack.c.l.s4 1983009808
    %v172 = vunpack.c.0.s8 %v171
    %v173 = vlaneseq
    %v174 = vshrl.u32 %v173, 7
    %v175 = vsub.s32 %v172, %v174
    %v176 = vrot.slane %v162, %v175
    %v177 = vcombine.high %v169, %v169
    %v178 = vcombine.high %v176, %v176
    %v179 = vcombine.high %v13, %v13
    %v181 = vunpack.c.l.s4 1983009808
    %v182 = vunpack.c.0.s8 %v181
    %v183 = vlaneseq
    %v184 = vshrl.u32 %v183, 7
    %v185 = vsub.s32 %v182, %v184
    %v186 = vrot.slane %v13, %v185
    %v188 = vunpack.c.l.s4 1983009808
    %v189 = vunpack.c.0.s8 %v188
    %v190 = vlaneseq
    %v191 = vshrl.u32 %v190, 7
    %v192 = vsub.s32 %v189, %v191
    %v193 = vrot.slane %v179, %v192
    %v194 = vcombine.high %v186, %v186
    %v195 = vcombine.high %v193, %v193
    %v197 = vunpack.c.l.s4 1983009808
    %v198 = vunpack.c.0.s8 %v197
    %v199 = vlaneseq
    %v200 = vshrl.u32 %v199, 7
    %v201 = vsub.s32 %v198, %v200
    %v202 = vrot.slane %v14, %v201
    %212 = vmatprep.subr.mxu0 0.0
    %213 = vmatpush1.msra.mxu0 %v30
    %214 = vmatprep.subr.mxu0 0.0
    %215 = vmatpush1.msra.mxu0 %v29
    %216 = vmatprep.subr.mxu0 0.0
    %217 = vmatpush1.msra.mxu0 %v28
    %218 = vmatprep.subr.mxu0 0.0
    %219 = vmatpush1.msra.mxu0 %v27
    %220 = vmatprep.subr.mxu0 0.0
    %221 = vmatpush1.msra.mxu0 %v26
    %222 = vmatprep.subr.mxu0 0.0
    %223 = vmatpush1.msra.mxu0 %v25
    %224 = vmatprep.subr.mxu0 0.0
    %225 = vmatpush1.msra.mxu0 %v24
    %226 = vmatprep.subr.mxu0 0.0
    %227 = vmatpush1.msra.mxu0 %v23
    %228 = vmatprep.subr.mxu0 0.0
    %229 = vmatpush1.msra.mxu0 %v22
    %230 = vmatprep.subr.mxu0 0.0
    %231 = vmatpush1.msra.mxu0 %v21
    %232 = vmatprep.subr.mxu0 0.0
    %233 = vmatpush1.msra.mxu0 %v20
    %234 = vmatprep.subr.mxu0 0.0
    %235 = vmatpush1.msra.mxu0 %v19
    %236 = vmatprep.subr.mxu0 0.0
    %237 = vmatpush1.msra.mxu0 %v18
    %238 = vmatprep.subr.mxu0 0.0
    %239 = vmatpush1.msra.mxu0 %v17
    %240 = vmatprep.subr.mxu0 0.0
    %241 = vmatpush1.msra.mxu0 %v16
    %242 = vmatprep.subr.mxu0 0.0
    %243 = vmatpush1.msra.mxu0 %v15
    %244 = vmatprep.subr.mxu0 0.0
    %245 = vmatpush2.msra.mxu0 %v46
    %246 = vmatprep.subr.mxu0 0.0
    %247 = vmatpush2.msra.mxu0 %v45
    %248 = vmatprep.subr.mxu0 0.0
    %249 = vmatpush2.msra.mxu0 %v44
    %250 = vmatprep.subr.mxu0 0.0
    %251 = vmatpush2.msra.mxu0 %v43
    %252 = vmatprep.subr.mxu0 0.0
    %253 = vmatpush2.msra.mxu0 %v42
    %254 = vmatprep.subr.mxu0 0.0
    %255 = vmatpush2.msra.mxu0 %v41
    %256 = vmatprep.subr.mxu0 0.0
    %257 = vmatpush2.msra.mxu0 %v40
    %258 = vmatprep.subr.mxu0 0.0
    %259 = vmatpush2.msra.mxu0 %v39
    %260 = vmatprep.subr.mxu0 0.0
    %261 = vmatpush2.msra.mxu0 %v38
    %262 = vmatprep.subr.mxu0 0.0
    %263 = vmatpush2.msra.mxu0 %v37
    %264 = vmatprep.subr.mxu0 0.0
    %265 = vmatpush2.msra.mxu0 %v36
    %266 = vmatprep.subr.mxu0 0.0
    %267 = vmatpush2.msra.mxu0 %v35
    %268 = vmatprep.subr.mxu0 0.0
    %269 = vmatpush2.msra.mxu0 %v34
    %270 = vmatprep.subr.mxu0 0.0
    %271 = vmatpush2.msra.mxu0 %v33
    %272 = vmatprep.subr.mxu0 0.0
    %273 = vmatpush2.msra.mxu0 %v32
    %274 = vmatprep.subr.mxu0 0.0
    %275 = vmatpush2.msra.mxu0 %v31
    %276 = vmatprep.mubr.f32.mxu0 %v177
    %277 = vmatmul.mubr.f32.gmra.mxu0 %v169
    %v278 = vpop.f32.mrf.mxu0
    %v279 = vadd.f32 0.0, %v278
    %v280 = vpop.f32.mrf.mxu0
    %281 = vdwg.mxu0
    %282 = vmatprep.subr.mxu0 0.0
    %283 = vmatpush1.msra.mxu0 %v62
    %284 = vmatprep.subr.mxu0 0.0
    %285 = vmatpush1.msra.mxu0 %v61
    %286 = vmatprep.subr.mxu0 0.0
    %287 = vmatpush1.msra.mxu0 %v60
    %288 = vmatprep.subr.mxu0 0.0
    %289 = vmatpush1.msra.mxu0 %v59
    %290 = vmatprep.subr.mxu0 0.0
    %291 = vmatpush1.msra.mxu0 %v58
    %292 = vmatprep.subr.mxu0 0.0
    %293 = vmatpush1.msra.mxu0 %v57
    %294 = vmatprep.subr.mxu0 0.0
    %295 = vmatpush1.msra.mxu0 %v56
    %296 = vmatprep.subr.mxu0 0.0
    %297 = vmatpush1.msra.mxu0 %v55
    %298 = vmatprep.subr.mxu0 0.0
    %299 = vmatpush1.msra.mxu0 %v54
    %300 = vmatprep.subr.mxu0 0.0
    %301 = vmatpush1.msra.mxu0 %v53
    %302 = vmatprep.subr.mxu0 0.0
    %303 = vmatpush1.msra.mxu0 %v52
    %304 = vmatprep.subr.mxu0 0.0
    %305 = vmatpush1.msra.mxu0 %v51
    %306 = vmatprep.subr.mxu0 0.0
    %307 = vmatpush1.msra.mxu0 %v50
    %308 = vmatprep.subr.mxu0 0.0
    %309 = vmatpush1.msra.mxu0 %v49
    %310 = vmatprep.subr.mxu0 0.0
    %311 = vmatpush1.msra.mxu0 %v48
    %312 = vmatprep.subr.mxu0 0.0
    %313 = vmatpush1.msra.mxu0 %v47
    %314 = vmatprep.subr.mxu0 0.0
    %315 = vmatpush2.msra.mxu0 %v78
    %316 = vmatprep.subr.mxu0 0.0
    %317 = vmatpush2.msra.mxu0 %v77
    %318 = vmatprep.subr.mxu0 0.0
    %319 = vmatpush2.msra.mxu0 %v76
    %320 = vmatprep.subr.mxu0 0.0
    %321 = vmatpush2.msra.mxu0 %v75
    %322 = vmatprep.subr.mxu0 0.0
    %323 = vmatpush2.msra.mxu0 %v74
    %324 = vmatprep.subr.mxu0 0.0
    %325 = vmatpush2.msra.mxu0 %v73
    %326 = vmatprep.subr.mxu0 0.0
    %327 = vmatpush2.msra.mxu0 %v72
    %328 = vmatprep.subr.mxu0 0.0
    %329 = vmatpush2.msra.mxu0 %v71
    %330 = vmatprep.subr.mxu0 0.0
    %331 = vmatpush2.msra.mxu0 %v70
    %332 = vmatprep.subr.mxu0 0.0
    %333 = vmatpush2.msra.mxu0 %v69
    %334 = vmatprep.subr.mxu0 0.0
    %335 = vmatpush2.msra.mxu0 %v68
    %336 = vmatprep.subr.mxu0 0.0
    %337 = vmatpush2.msra.mxu0 %v67
    %338 = vmatprep.subr.mxu0 0.0
    %339 = vmatpush2.msra.mxu0 %v66
    %340 = vmatprep.subr.mxu0 0.0
    %341 = vmatpush2.msra.mxu0 %v65
    %342 = vmatprep.subr.mxu0 0.0
    %343 = vmatpush2.msra.mxu0 %v64
    %344 = vmatprep.subr.mxu0 0.0
    %345 = vmatpush2.msra.mxu0 %v63
    %346 = vmatprep.mubr.f32.mxu0 %v178
    %347 = vmatmul.mubr.f32.gmra.mxu0 %v176
    %v348 = vpop.f32.mrf.mxu0
    %v349 = vadd.f32 %v279, %v348
    %v350 = vpop.f32.mrf.mxu0
    %351 = vdwg.mxu0
    %352 = vmatprep.subr.mxu0 0.0
    %353 = vmatpush1.msra.mxu0 %v94
    %354 = vmatprep.subr.mxu0 0.0
    %355 = vmatpush1.msra.mxu0 %v93
    %356 = vmatprep.subr.mxu0 0.0
    %357 = vmatpush1.msra.mxu0 %v92
    %358 = vmatprep.subr.mxu0 0.0
    %359 = vmatpush1.msra.mxu0 %v91
    %360 = vmatprep.subr.mxu0 0.0
    %361 = vmatpush1.msra.mxu0 %v90
    %362 = vmatprep.subr.mxu0 0.0
    %363 = vmatpush1.msra.mxu0 %v89
    %364 = vmatprep.subr.mxu0 0.0
    %365 = vmatpush1.msra.mxu0 %v88
    %366 = vmatprep.subr.mxu0 0.0
    %367 = vmatpush1.msra.mxu0 %v87
    %368 = vmatprep.subr.mxu0 0.0
    %369 = vmatpush1.msra.mxu0 %v86
    %370 = vmatprep.subr.mxu0 0.0
    %371 = vmatpush1.msra.mxu0 %v85
    %372 = vmatprep.subr.mxu0 0.0
    %373 = vmatpush1.msra.mxu0 %v84
    %374 = vmatprep.subr.mxu0 0.0
    %375 = vmatpush1.msra.mxu0 %v83
    %376 = vmatprep.subr.mxu0 0.0
    %377 = vmatpush1.msra.mxu0 %v82
    %378 = vmatprep.subr.mxu0 0.0
    %379 = vmatpush1.msra.mxu0 %v81
    %380 = vmatprep.subr.mxu0 0.0
    %381 = vmatpush1.msra.mxu0 %v80
    %382 = vmatprep.subr.mxu0 0.0
    %383 = vmatpush1.msra.mxu0 %v79
    %384 = vmatprep.subr.mxu0 0.0
    %385 = vmatpush2.msra.mxu0 %v110
    %386 = vmatprep.subr.mxu0 0.0
    %387 = vmatpush2.msra.mxu0 %v109
    %388 = vmatprep.subr.mxu0 0.0
    %389 = vmatpush2.msra.mxu0 %v108
    %390 = vmatprep.subr.mxu0 0.0
    %391 = vmatpush2.msra.mxu0 %v107
    %392 = vmatprep.subr.mxu0 0.0
    %393 = vmatpush2.msra.mxu0 %v106
    %394 = vmatprep.subr.mxu0 0.0
    %395 = vmatpush2.msra.mxu0 %v105
    %396 = vmatprep.subr.mxu0 0.0
    %397 = vmatpush2.msra.mxu0 %v104
    %398 = vmatprep.subr.mxu0 0.0
    %399 = vmatpush2.msra.mxu0 %v103
    %400 = vmatprep.subr.mxu0 0.0
    %401 = vmatpush2.msra.mxu0 %v102
    %402 = vmatprep.subr.mxu0 0.0
    %403 = vmatpush2.msra.mxu0 %v101
    %404 = vmatprep.subr.mxu0 0.0
    %405 = vmatpush2.msra.mxu0 %v100
    %406 = vmatprep.subr.mxu0 0.0
    %407 = vmatpush2.msra.mxu0 %v99
    %408 = vmatprep.subr.mxu0 0.0
    %409 = vmatpush2.msra.mxu0 %v98
    %410 = vmatprep.subr.mxu0 0.0
    %411 = vmatpush2.msra.mxu0 %v97
    %412 = vmatprep.subr.mxu0 0.0
    %413 = vmatpush2.msra.mxu0 %v96
    %414 = vmatprep.subr.mxu0 0.0
    %415 = vmatpush2.msra.mxu0 %v95
    %416 = vmatprep.mubr.f32.mxu0 %v194
    %417 = vmatmul.mubr.f32.gmra.mxu0 %v186
    %v418 = vpop.f32.mrf.mxu0
    %v419 = vadd.f32 %v349, %v418
    %v420 = vpop.f32.mrf.mxu0
    %421 = vdwg.mxu0
    %422 = vmatprep.subr.mxu0 0.0
    %423 = vmatpush1.msra.mxu0 %v126
    %424 = vmatprep.subr.mxu0 0.0
    %425 = vmatpush1.msra.mxu0 %v125
    %426 = vmatprep.subr.mxu0 0.0
    %427 = vmatpush1.msra.mxu0 %v124
    %428 = vmatprep.subr.mxu0 0.0
    %429 = vmatpush1.msra.mxu0 %v123
    %430 = vmatprep.subr.mxu0 0.0
    %431 = vmatpush1.msra.mxu0 %v122
    %432 = vmatprep.subr.mxu0 0.0
    %433 = vmatpush1.msra.mxu0 %v121
    %434 = vmatprep.subr.mxu0 0.0
    %435 = vmatpush1.msra.mxu0 %v120
    %436 = vmatprep.subr.mxu0 0.0
    %437 = vmatpush1.msra.mxu0 %v119
    %438 = vmatprep.subr.mxu0 0.0
    %439 = vmatpush1.msra.mxu0 %v118
    %440 = vmatprep.subr.mxu0 0.0
    %441 = vmatpush1.msra.mxu0 %v117
    %442 = vmatprep.subr.mxu0 0.0
    %443 = vmatpush1.msra.mxu0 %v116
    %444 = vmatprep.subr.mxu0 0.0
    %445 = vmatpush1.msra.mxu0 %v115
    %446 = vmatprep.subr.mxu0 0.0
    %447 = vmatpush1.msra.mxu0 %v114
    %448 = vmatprep.subr.mxu0 0.0
    %449 = vmatpush1.msra.mxu0 %v113
    %450 = vmatprep.subr.mxu0 0.0
    %451 = vmatpush1.msra.mxu0 %v112
    %452 = vmatprep.subr.mxu0 0.0
    %453 = vmatpush1.msra.mxu0 %v111
    %454 = vmatprep.subr.mxu0 0.0
    %455 = vmatpush2.msra.mxu0 %v142
    %456 = vmatprep.subr.mxu0 0.0
    %457 = vmatpush2.msra.mxu0 %v141
    %458 = vmatprep.subr.mxu0 0.0
    %459 = vmatpush2.msra.mxu0 %v140
    %460 = vmatprep.subr.mxu0 0.0
    %461 = vmatpush2.msra.mxu0 %v139
    %462 = vmatprep.subr.mxu0 0.0
    %463 = vmatpush2.msra.mxu0 %v138
    %464 = vmatprep.subr.mxu0 0.0
    %465 = vmatpush2.msra.mxu0 %v137
    %466 = vmatprep.subr.mxu0 0.0
    %467 = vmatpush2.msra.mxu0 %v136
    %468 = vmatprep.subr.mxu0 0.0
    %469 = vmatpush2.msra.mxu0 %v135
    %470 = vmatprep.subr.mxu0 0.0
    %471 = vmatpush2.msra.mxu0 %v134
    %472 = vmatprep.subr.mxu0 0.0
    %473 = vmatpush2.msra.mxu0 %v133
    %474 = vmatprep.subr.mxu0 0.0
    %475 = vmatpush2.msra.mxu0 %v132
    %476 = vmatprep.subr.mxu0 0.0
    %477 = vmatpush2.msra.mxu0 %v131
    %478 = vmatprep.subr.mxu0 0.0
    %479 = vmatpush2.msra.mxu0 %v130
    %480 = vmatprep.subr.mxu0 0.0
    %481 = vmatpush2.msra.mxu0 %v129
    %482 = vmatprep.subr.mxu0 0.0
    %483 = vmatpush2.msra.mxu0 %v128
    %484 = vmatprep.subr.mxu0 0.0
    %485 = vmatpush2.msra.mxu0 %v127
    %486 = vmatprep.mubr.f32.mxu0 %v195
    %487 = vmatmul.mubr.f32.gmra.mxu0 %v193
    %v488 = vpop.f32.mrf.mxu0
    %v489 = vadd.f32 %v419, %v488
    %v490 = vpop.f32.mrf.mxu0
    %491 = vdwg.mxu0
    %492 = vmatprep.subr.mxu0 0.0
    %493 = vmatpush1.msra.mxu0 %v158
    %494 = vmatprep.subr.mxu0 0.0
    %495 = vmatpush1.msra.mxu0 %v157
    %496 = vmatprep.subr.mxu0 0.0
    %497 = vmatpush1.msra.mxu0 %v156
    %498 = vmatprep.subr.mxu0 0.0
    %499 = vmatpush1.msra.mxu0 %v155
    %500 = vmatprep.subr.mxu0 0.0
    %501 = vmatpush1.msra.mxu0 %v154
    %502 = vmatprep.subr.mxu0 0.0
    %503 = vmatpush1.msra.mxu0 %v153
    %504 = vmatprep.subr.mxu0 0.0
    %505 = vmatpush1.msra.mxu0 %v152
    %506 = vmatprep.subr.mxu0 0.0
    %507 = vmatpush1.msra.mxu0 %v151
    %508 = vmatprep.subr.mxu0 0.0
    %509 = vmatpush1.msra.mxu0 %v150
    %510 = vmatprep.subr.mxu0 0.0
    %511 = vmatpush1.msra.mxu0 %v149
    %512 = vmatprep.subr.mxu0 0.0
    %513 = vmatpush1.msra.mxu0 %v148
    %514 = vmatprep.subr.mxu0 0.0
    %515 = vmatpush1.msra.mxu0 %v147
    %516 = vmatprep.subr.mxu0 0.0
    %517 = vmatpush1.msra.mxu0 %v146
    %518 = vmatprep.subr.mxu0 0.0
    %519 = vmatpush1.msra.mxu0 %v145
    %520 = vmatprep.subr.mxu0 0.0
    %521 = vmatpush1.msra.mxu0 %v144
    %522 = vmatprep.subr.mxu0 0.0
    %523 = vmatpush1.msra.mxu0 %v143
    %524 = vmatprep.subr.mxu0 0.0
    %525 = vmatpush2.msra.mxu0 0.0
    %526 = vmatprep.subr.mxu0 0.0
    %527 = vmatpush2.msra.mxu0 0.0
    %528 = vmatprep.subr.mxu0 0.0
    %529 = vmatpush2.msra.mxu0 0.0
    %530 = vmatprep.subr.mxu0 0.0
    %531 = vmatpush2.msra.mxu0 0.0
    %532 = vmatprep.subr.mxu0 0.0
    %533 = vmatpush2.msra.mxu0 0.0
    %534 = vmatprep.subr.mxu0 0.0
    %535 = vmatpush2.msra.mxu0 0.0
    %536 = vmatprep.subr.mxu0 0.0
    %537 = vmatpush2.msra.mxu0 0.0
    %538 = vmatprep.subr.mxu0 0.0
    %539 = vmatpush2.msra.mxu0 0.0
    %540 = vmatprep.subr.mxu0 0.0
    %541 = vmatpush2.msra.mxu0 0.0
    %542 = vmatprep.subr.mxu0 0.0
    %543 = vmatpush2.msra.mxu0 0.0
    %544 = vmatprep.subr.mxu0 0.0
    %545 = vmatpush2.msra.mxu0 0.0
    %546 = vmatprep.subr.mxu0 0.0
    %547 = vmatpush2.msra.mxu0 0.0
    %548 = vmatprep.subr.mxu0 0.0
    %549 = vmatpush2.msra.mxu0 0.0
    %550 = vmatprep.subr.mxu0 0.0
    %551 = vmatpush2.msra.mxu0 0.0
    %552 = vmatprep.subr.mxu0 0.0
    %553 = vmatpush2.msra.mxu0 0.0
    %554 = vmatprep.subr.mxu0 0.0
    %555 = vmatpush2.msra.mxu0 0.0
    %556 = vmatprep.mubr.f32.mxu0 0.0
    %557 = vmatmul.mubr.f32.gmra.mxu0 %v202
    %v558 = vpop.f32.mrf.mxu0
    %v559 = vadd.f32 %v489, %v558
    %v560 = vpop.f32.mrf.mxu0
    %561 = vdwg.mxu0
    %v562 = vmul.f32 %v559, %v559
    %vm563 = vcmask 254976
    %v564 = vsel %vm563, %v562, 0.0
    %565 = vadd.xlane.f32.xlu0 %v564
    %v566 = vpop.xlane.xlu0 %565
    %v567 = vrsqrt.pop %v566
    %v568 = vmul.f32 %v566, %v567
    %vm569 = vcmp.eq.f32.partialorder %v566, inf
    %v570 = vsel %vm569, %v566, %v568
    %vm571 = vcmp.eq.f32.partialorder %v566, 0.0
    %v572 = vand.u32 %v566, 2147483648
    %v573 = vsel %vm571, %v572, %v570
    %v574 = vadd.f32 %v566, 1.0
    %v575 = vadd.f32 %v573, 1e-08
    %v576 = vmul.f32 %v574, %v575
    %v577 = vrcp.pop %v576
    %v578 = vmul.f32 %v566, %v577
    %v579 = vmul.f32 %v578, %v559
    %580 = vst.msk [vmem:[#allocation2] sm:$0x3] %vm563, %v579
    // Predicated region
    $region10: #{tpu_custom_call.1} parent=1 // pred_check
      _
    $region11: #{tpu_custom_call.1} parent=1 // pred_check_branch
      %582 = sbr.rel (0) target = $region13
    $region12: #{tpu_custom_call.1} parent=1 // pred_region
      %s584 = ssub.s32 32, 32
      %585 = vsyncadd [#allocation3], %s584
      %s587 = sshll.u32 [#allocation2], 4
      %s588 = int_to_ptr.vmem [resolvable:$true] %s587
      %590 = dma.vmem_to_hbm [thread:$0]  %s588, 32, %s2, [#allocation3]
    $region13: #{tpu_custom_call.1} parent=1 // pred_fallthru
      _
    // Predicated region
    $region14: #{tpu_custom_call.1} parent=1 // pred_check
      _
    $region15: #{tpu_custom_call.1} parent=1 // pred_check_branch
      %592 = sbr.rel (0) target = $region17
    $region16: #{tpu_custom_call.1} parent=1 // pred_region
      %593 = dma.done [#allocation3], 32
    $region17: #{tpu_custom_call.1} parent=1 // pred_fallthru
      _
    %594 = vsyncpa [#allocation3], 1

</llo_original>
